<compile_context>
chip_gen: v7x
topology: tpu7x:2x2x1
jax: 0.10.0
libtpu: 0.0.40
codegen_flags: <defaults>
</compile_context>

<pallas_src>
import functools

import jax
import jax.numpy as jnp
from jax import lax
from jax.experimental import pallas as pl
from jax.experimental.pallas import tpu as pltpu


def _series_decomp_kernel(x_ref, res_ref, mean_ref, *, kernel_size: int, time_axis: int):
    # x_ref block: (1, D0, D1).  The moving average runs along `time_axis` of the
    # squeezed 2-D tile (0 = sublane axis, 1 = lane axis).
    x = x_ref[0]                                   # (D0, D1), input dtype
    shape = x.shape
    L = shape[time_axis]
    pad = kernel_size // 2

    pos = lax.broadcasted_iota(jnp.int32, shape, time_axis)

    # d == 0 term (no shift, no mask); per-term f32 cast, accumulate in f32.
    acc = x.astype(jnp.float32)
    for d in range(-pad, pad + 1):
        if d == 0 or abs(d) >= L:
            # |d| >= L contributes only zeros (entire shifted window is padding).
            continue
        # y[i] = x[(i + d) mod L]; wrapped positions are masked to zero below.
        shifted = pltpu.roll(x, shift=(-d) % L, axis=time_axis)
        if d > 0:
            valid = pos < (L - d)                  # drop wrapped tail
        else:
            valid = pos >= (-d)                    # drop wrapped head
        acc = acc + jnp.where(valid, shifted, 0).astype(jnp.float32)

    mean = acc * (1.0 / kernel_size)               # count_include_pad=True
    mean_ref[0] = mean.astype(mean_ref.dtype)
    res_ref[0] = (x.astype(jnp.float32) - mean).astype(res_ref.dtype)


def _pick_tile_c(C: int) -> int:
    """Lane-dense channel tile: multiple of 128 when possible, else full extent."""
    if C % 128 != 0:
        return C                                   # full-extent last dim is allowed
    for t in (512, 384, 256, 128):
        if C % t == 0:
            return t
    return 128


def _decomp_3d(x3, kernel_size: int, time_axis: int):
    """x3: (B, D0, D1); moving average along `time_axis` (0 -> D0, 1 -> D1)."""
    B, D0, D1 = x3.shape
    tile = D1 if time_axis == 1 else _pick_tile_c(D1)
    n_tiles = D1 // tile
    block = (1, D0, tile)

    # Per-step VMEM: 3 pipelined buffers (1 in + 2 out, double-buffered) plus the
    # in-kernel f32 working set.  Raise the scoped limit only when needed, capped
    # at 64 MiB so it stays safe on every TPU generation (v7x physical VMEM).
    block_bytes = D0 * tile * x3.dtype.itemsize
    est = 6 * block_bytes + 2 * D0 * tile * 4
    vmem_limit = None if est <= 32 * 1024 * 1024 else min(est, 64 * 1024 * 1024)

    kernel = functools.partial(
        _series_decomp_kernel, kernel_size=kernel_size, time_axis=time_axis)

    res, mean = pl.pallas_call(
        kernel,
        out_shape=(
            jax.ShapeDtypeStruct(x3.shape, x3.dtype),
            jax.ShapeDtypeStruct(x3.shape, x3.dtype),
        ),
        grid=(B, n_tiles),
        in_specs=[pl.BlockSpec(block, lambda b, c: (b, 0, c))],
        out_specs=(
            pl.BlockSpec(block, lambda b, c: (b, 0, c)),
            pl.BlockSpec(block, lambda b, c: (b, 0, c)),
        ),
        compiler_params=pltpu.CompilerParams(
            dimension_semantics=("parallel", "parallel"),
            vmem_limit_bytes=vmem_limit,
        ),
    )(x3)
    return res, mean


@functools.partial(jax.jit, static_argnums=(1,))
def series_decomp(x, kernel_size: int):
    """x: (B, L, C). Returns (res, moving_mean), both (B, L, C)."""
    assert kernel_size % 2 == 1, "kernel_size must be odd so output length == L"
    B, L, C = x.shape
    if C < 128:
        # Small channel count: put the time axis on lanes (lane-dense stores,
        # lane rolls on the XLU).
        xt = jnp.transpose(x, (0, 2, 1))           # (B, C, L)
        res_t, mean_t = _decomp_3d(xt, kernel_size, time_axis=1)
        return (jnp.transpose(res_t, (0, 2, 1)),
                jnp.transpose(mean_t, (0, 2, 1)))
    # Wide channels: channel-tiled grid, time axis on sublanes.
    return _decomp_3d(x, kernel_size, time_axis=0)


def _reference(x, kernel_size):
    # Pure-JAX reference replicating AvgPool1d(stride=1, padding=k//2, zero pad,
    # count_include_pad=True) along the L axis.
    pad = kernel_size // 2
    xp = jnp.pad(x, ((0, 0), (pad, pad), (0, 0)))
    L = x.shape[1]
    mean = sum(xp[:, j:j + L, :] for j in range(kernel_size)) / kernel_size
    return x - mean, mean


if __name__ == "__main__":
    key = jax.random.PRNGKey(0)
    k_small, k_wide = jax.random.split(key)

    # --- Path 1: small channel count (C < 128) -> transposed, time on lanes ---
    B, L, C = 2, 128, 8
    kernel_size = 5
    x_small = jax.random.normal(k_small, (B, L, C), dtype=jnp.float32)
    res, mean = series_decomp(x_small, kernel_size)
    jax.block_until_ready((res, mean))
    res_ref, mean_ref = _reference(x_small, kernel_size)
    assert jnp.allclose(res, res_ref, atol=1e-5), "res mismatch (small-C path)"
    assert jnp.allclose(mean, mean_ref, atol=1e-5), "mean mismatch (small-C path)"

    # --- Path 2: wide channels (C multiple of 128) -> channel-tiled grid ---
    B2, L2, C2 = 2, 16, 1024          # tile = 512 -> grid (2, 2)
    kernel_size2 = 7
    x_wide = jax.random.normal(k_wide, (B2, L2, C2), dtype=jnp.float32)
    res2, mean2 = series_decomp(x_wide, kernel_size2)
    jax.block_until_ready((res2, mean2))
    res2_ref, mean2_ref = _reference(x_wide, kernel_size2)
    assert jnp.allclose(res2, res2_ref, atol=1e-5), "res mismatch (wide-C path)"
    assert jnp.allclose(mean2, mean2_ref, atol=1e-5), "mean mismatch (wide-C path)"

    print("KERNEL_OK")
</pallas_src>

<mosaic_0001>
module attributes {stable_mosaic.version = 11 : i64} {
  func.func @_series_decomp_kernel(%arg0: i32, %arg1: i32, %arg2: memref<1x8x128xf32, #tpu.memory_space<vmem>>, %arg3: memref<1x8x128xf32, #tpu.memory_space<vmem>>, %arg4: memref<1x8x128xf32, #tpu.memory_space<vmem>>) attributes {dimension_semantics = [#tpu.dimension_semantics<parallel>, #tpu.dimension_semantics<parallel>], iteration_bounds = array<i64: 2, 1>, scalar_prefetch = 0 : i64, scratch_operands = 0 : i64, tpu.core_type = #tpu.core_type<tc>, window_params = [{transform_indices = @transform_0, window_bounds = array<i64: 1, 8, 128>}, {transform_indices = @transform_1, window_bounds = array<i64: 1, 8, 128>}, {transform_indices = @transform_2, window_bounds = array<i64: 1, 8, 128>}]} {
    %c0 = arith.constant 0 : index
    %c0_0 = arith.constant 0 : index
    %c0_1 = arith.constant 0 : index
    %0 = vector.load %arg2[%c0, %c0_0, %c0_1] : memref<1x8x128xf32, #tpu.memory_space<vmem>>, vector<1x8x128xf32>
    %1 = vector.shape_cast %0 : vector<1x8x128xf32> to vector<8x128xf32>
    %2 = tpu.iota {dimensions = array<i32: 1>} : vector<8x128xi32>
    %c2_i32 = arith.constant 2 : i32
    %3 = tpu.dynamic_rotate %1 by %c2_i32 dim 1 : vector<8x128xf32>, i32 -> vector<8x128xf32>
    %c2_i32_2 = arith.constant 2 : i32
    %4 = vector.broadcast %c2_i32_2 : i32 to vector<8x128xi32>
    %5 = arith.cmpi sge, %2, %4 : vector<8x128xi32>
    %c0_i32 = arith.constant 0 : i32
    %6 = arith.sitofp %c0_i32 : i32 to f32
    %7 = vector.broadcast %6 : f32 to vector<8x128xf32>
    %8 = arith.select %5, %3, %7 : vector<8x128xi1>, vector<8x128xf32>
    %9 = arith.addf %1, %8 : vector<8x128xf32>
    %c1_i32 = arith.constant 1 : i32
    %10 = tpu.dynamic_rotate %1 by %c1_i32 dim 1 : vector<8x128xf32>, i32 -> vector<8x128xf32>
    %c1_i32_3 = arith.constant 1 : i32
    %11 = vector.broadcast %c1_i32_3 : i32 to vector<8x128xi32>
    %12 = arith.cmpi sge, %2, %11 : vector<8x128xi32>
    %c0_i32_4 = arith.constant 0 : i32
    %13 = arith.sitofp %c0_i32_4 : i32 to f32
    %14 = vector.broadcast %13 : f32 to vector<8x128xf32>
    %15 = arith.select %12, %10, %14 : vector<8x128xi1>, vector<8x128xf32>
    %16 = arith.addf %9, %15 : vector<8x128xf32>
    %c127_i32 = arith.constant 127 : i32
    %17 = tpu.dynamic_rotate %1 by %c127_i32 dim 1 : vector<8x128xf32>, i32 -> vector<8x128xf32>
    %c127_i32_5 = arith.constant 127 : i32
    %18 = vector.broadcast %c127_i32_5 : i32 to vector<8x128xi32>
    %19 = arith.cmpi slt, %2, %18 : vector<8x128xi32>
    %c0_i32_6 = arith.constant 0 : i32
    %20 = arith.sitofp %c0_i32_6 : i32 to f32
    %21 = vector.broadcast %20 : f32 to vector<8x128xf32>
    %22 = arith.select %19, %17, %21 : vector<8x128xi1>, vector<8x128xf32>
    %23 = arith.addf %16, %22 : vector<8x128xf32>
    %c126_i32 = arith.constant 126 : i32
    %24 = tpu.dynamic_rotate %1 by %c126_i32 dim 1 : vector<8x128xf32>, i32 -> vector<8x128xf32>
    %c126_i32_7 = arith.constant 126 : i32
    %25 = vector.broadcast %c126_i32_7 : i32 to vector<8x128xi32>
    %26 = arith.cmpi slt, %2, %25 : vector<8x128xi32>
    %c0_i32_8 = arith.constant 0 : i32
    %27 = arith.sitofp %c0_i32_8 : i32 to f32
    %28 = vector.broadcast %27 : f32 to vector<8x128xf32>
    %29 = arith.select %26, %24, %28 : vector<8x128xi1>, vector<8x128xf32>
    %30 = arith.addf %23, %29 : vector<8x128xf32>
    %cst = arith.constant 2.000000e-01 : f32
    %31 = vector.broadcast %cst : f32 to vector<8x128xf32>
    %32 = arith.mulf %30, %31 : vector<8x128xf32>
    %c0_9 = arith.constant 0 : index
    %c0_10 = arith.constant 0 : index
    %c0_11 = arith.constant 0 : index
    %33 = vector.load %arg4[%c0_9, %c0_10, %c0_11] : memref<1x8x128xf32, #tpu.memory_space<vmem>>, vector<1x8x128xf32>
    %34 = vector.shape_cast %33 : vector<1x8x128xf32> to vector<8x128xf32>
    %35 = vector.shape_cast %32 : vector<8x128xf32> to vector<1x8x128xf32>
    tpu.vector_store %arg4[%c0_9, %c0_10, %c0_11], %35 {strides = array<i32>} : memref<1x8x128xf32, #tpu.memory_space<vmem>>, vector<1x8x128xf32>,
    %36 = arith.subf %1, %32 : vector<8x128xf32>
    %c0_12 = arith.constant 0 : index
    %c0_13 = arith.constant 0 : index
    %c0_14 = arith.constant 0 : index
    %37 = vector.load %arg3[%c0_12, %c0_13, %c0_14] : memref<1x8x128xf32, #tpu.memory_space<vmem>>, vector<1x8x128xf32>
    %38 = vector.shape_cast %37 : vector<1x8x128xf32> to vector<8x128xf32>
    %39 = vector.shape_cast %36 : vector<8x128xf32> to vector<1x8x128xf32>
    tpu.vector_store %arg3[%c0_12, %c0_13, %c0_14], %39 {strides = array<i32>} : memref<1x8x128xf32, #tpu.memory_space<vmem>>, vector<1x8x128xf32>,
    return
  }
  func.func @transform_0(%arg0: i32, %arg1: i32) -> (i32, i32, i32) {
    %c0_i32 = arith.constant 0 : i32
    %c0_i32_0 = arith.constant 0 : i32
    return %arg0, %c0_i32, %arg1 : i32, i32, i32
  }
  func.func @transform_1(%arg0: i32, %arg1: i32) -> (i32, i32, i32) {
    %c0_i32 = arith.constant 0 : i32
    %c0_i32_0 = arith.constant 0 : i32
    return %arg0, %c0_i32, %arg1 : i32, i32, i32
  }
  func.func @transform_2(%arg0: i32, %arg1: i32) -> (i32, i32, i32) {
    %c0_i32 = arith.constant 0 : i32
    %c0_i32_0 = arith.constant 0 : i32
    return %arg0, %c0_i32, %arg1 : i32, i32, i32
  }
}

</mosaic_0001>

<llo_original>
// kernel: series_decomp.1
$region0: #{series_decomp.1}
  #allocation0 [shape = 'u32[]', space=smem, size = 0x4, offset = 0x4, fixed_abs, tag = 'smem constant byte address 0x4 - core index']
  #allocation1 [shape = 'u32[144,128]{1,0:T(1,128)}', space=vmem, size = 0x12000, scoped, tag = 'internal scratch']
  %s0 = inlined_call_operand.hbm [shape: f32[2,8,128], index: 0, kind: input, shape index: {}]
  %s1 = inlined_call_operand.hbm [shape: f32[2,8,128], index: 1, kind: output, shape index: {0}]
  %s2 = inlined_call_operand.hbm [shape: f32[2,8,128], index: 2, kind: output, shape index: {1}]
  %3 = xla_tuple %s1, %s2
  %s4 = sld [smem:[#allocation0]]
  $region49: #{series_decomp.1} parent=0
    _
  %s6 = ssub.s32 1, %s4
  %s7 = scalar_select 0, %s6, %s4
  $region1: #{series_decomp.1} parent=0
    #allocation2 [shape = 'u8[8192]{0}', space=vmem, size = 0x2000, scoped, tag = 'input window, operand 0']
    #allocation3 [shape = 's32[2]{0}', space=sflag, size = 0x8, scoped, tag = 'scoped memory for series_decomp.1']
    #allocation4 [shape = 's32[2]{0}', space=sflag, size = 0x8, scoped, tag = 'scoped memory for series_decomp.1']
    #allocation5 [shape = 'u8[8192]{0}', space=vmem, size = 0x2000, scoped, tag = 'output window, operand 0']
    #allocation6 [shape = 'u8[8192]{0}', space=vmem, size = 0x2000, scoped, tag = 'output window, operand 1']
    #allocation7 [shape = 's32[2]{0}', space=sflag, size = 0x8, scoped, tag = 'scoped memory for series_decomp.1']
    %8 = vsyncpa [#allocation3], 0
    %s9 = scalar_lea.sflag [#allocation3], 1
    %10 = vsyncpa %s9, 0
    %11 = vsyncpa [#allocation4], 0
    %s12 = scalar_lea.sflag [#allocation4], 1
    %13 = vsyncpa %s12, 0
    %14 = vsyncpa [#allocation7], 0
    %s15 = scalar_lea.sflag [#allocation7], 1
    %16 = vsyncpa %s15, 0
    loop: start=0, step=1, limit=4
    $region2: #{series_decomp.1} parent=1 // loop_pre_header
      _
    $region3: #{series_decomp.1} parent=1 // loop_header
      %s18 = sphi 0, %s22
      %p19 = scmp.ge.s32.totalorder %s18, 4
      %s25 = sphi 0, %s37
      %s26 = sphi 0, %s33
      %s27 = sphi 0, %s25
      %s28 = sphi 0, %s26
      %s29 = sphi 0, %s27
      %s30 = sphi 0, %s28
      %s42 = sphi 0, %s44
      %s45 = sphi 0, %s42
      %s46 = sphi 0, %s45
      %s62 = sphi 0, %s46
      %s70 = sphi 0, %s72
      %s73 = sphi 0, %s70
      %s74 = sphi 0, %s73
      %s90 = sphi 0, %s74
      %s98 = sphi 0, %s100
      %s101 = sphi 0, %s98
      %s102 = sphi 0, %s101
      %s118 = sphi 0, %s102
    $region4: #{series_decomp.1} parent=1 // loop_header_branch
      %21 = sbr.rel (%p19) target = $region8
    $region5: #{series_decomp.1} parent=1 // loop_body
      %s23 = ssub.s32 %s18, 1
      %s24 = ssub.s32 %s18, 2
      %s31 = sadd.s32 1, %s26
      %p32 = scmp.ge.s32.totalorder %s31, 1
      %s33 = scalar_select %p32, 0, %s31
      %s34 = sadd.s32 1, %s25
      %s35 = scalar_select %p32, %s34, %s25
      %p36 = scmp.ge.s32.totalorder %s35, 2
      %s37 = scalar_select %p36, 0, %s35
      %s38 = ssub.s32 %s25, %s37
      %s39 = ssub.s32 %s26, %s33
      %s40 = sor.u32 %s38, %s39
      %p41 = scmp.eq.s32.totalorder %s40, 0
      %s43 = sadd.s32 %s42, 1
      %s44 = scalar_select %p41, %s42, %s43
      %p47 = pneg %p41
      %p48 = scmp.eq.s32.totalorder %s18, 1
      %p49 = por %p47, %p48
      %p50 = scmp.ne.s32.totalorder %s42, %s45
      %p51 = scmp.eq.s32.totalorder %s18, 0
      %p52 = por %p50, %p51
      %p53 = scmp.ne.s32.totalorder %s42, %s45
      %p54 = scmp.eq.s32.totalorder %s23, 1
      %p55 = por %p53, %p54
      %p56 = scmp.ne.s32.totalorder %s45, %s46
      %p57 = scmp.eq.s32.totalorder %s23, 0
      %p58 = por %p56, %p57
      %p59 = scmp.ne.s32.totalorder %s45, %s46
      %p60 = scmp.eq.s32.totalorder %s24, 1
      %p61 = por %p59, %p60
      %p63 = scmp.ne.s32.totalorder %s46, %s62
      %p64 = scmp.eq.s32.totalorder %s24, 0
      %p65 = por %p63, %p64
      %s66 = ssub.s32 %s25, %s37
      %s67 = ssub.s32 %s26, %s33
      %s68 = sor.u32 %s66, %s67
      %p69 = scmp.eq.s32.totalorder %s68, 0
      %s71 = sadd.s32 %s70, 1
      %s72 = scalar_select %p69, %s70, %s71
      %p75 = pneg %p69
      %p76 = scmp.eq.s32.totalorder %s18, 1
      %p77 = por %p75, %p76
      %p78 = scmp.ne.s32.totalorder %s70, %s73
      %p79 = scmp.eq.s32.totalorder %s18, 0
      %p80 = por %p78, %p79
      %p81 = scmp.ne.s32.totalorder %s70, %s73
      %p82 = scmp.eq.s32.totalorder %s23, 1
      %p83 = por %p81, %p82
      %p84 = scmp.ne.s32.totalorder %s73, %s74
      %p85 = scmp.eq.s32.totalorder %s23, 0
      %p86 = por %p84, %p85
      %p87 = scmp.ne.s32.totalorder %s73, %s74
      %p88 = scmp.eq.s32.totalorder %s24, 1
      %p89 = por %p87, %p88
      %p91 = scmp.ne.s32.totalorder %s74, %s90
      %p92 = scmp.eq.s32.totalorder %s24, 0
      %p93 = por %p91, %p92
      %s94 = ssub.s32 %s25, %s37
      %s95 = ssub.s32 %s26, %s33
      %s96 = sor.u32 %s94, %s95
      %p97 = scmp.eq.s32.totalorder %s96, 0
      %s99 = sadd.s32 %s98, 1
      %s100 = scalar_select %p97, %s98, %s99
      %p103 = pneg %p97
      %p104 = scmp.eq.s32.totalorder %s18, 1
      %p105 = por %p103, %p104
      %p106 = scmp.ne.s32.totalorder %s98, %s101
      %p107 = scmp.eq.s32.totalorder %s18, 0
      %p108 = por %p106, %p107
      %p109 = scmp.ne.s32.totalorder %s98, %s101
      %p110 = scmp.eq.s32.totalorder %s23, 1
      %p111 = por %p109, %p110
      %p112 = scmp.ne.s32.totalorder %s101, %s102
      %p113 = scmp.eq.s32.totalorder %s23, 0
      %p114 = por %p112, %p113
      %p115 = scmp.ne.s32.totalorder %s101, %s102
      %p116 = scmp.eq.s32.totalorder %s24, 1
      %p117 = por %p115, %p116
      %p119 = scmp.ne.s32.totalorder %s102, %s118
      %p120 = scmp.eq.s32.totalorder %s24, 0
      %p121 = por %p119, %p120
      %p122 = scmp.le.s32.totalorder 1, %s18
      %p123 = scmp.lt.s32.totalorder %s18, 3
      %p124 = pnand %p122, %p123
      %p125 = pneg %p124
      // Predicated region
      $region9: #{series_decomp.1} parent=5 // pred_check
        _
      $region10: #{series_decomp.1} parent=5 // pred_check_branch
        %127 = sbr.rel (%p124) target = $region12
      $region11: #{series_decomp.1} parent=5 // pred_region
        %s128 = ssub.s32 %s18, 1
      $region12: #{series_decomp.1} parent=5 // pred_fallthru
        _
      %p129 = scmp.lt.s32.totalorder %s18, 2
      // Predicated region
      $region13: #{series_decomp.1} parent=5 // pred_check
        %p130 = pneg %p129
      $region14: #{series_decomp.1} parent=5 // pred_check_branch
        %132 = sbr.rel (%p130) target = $region16
      $region15: #{series_decomp.1} parent=5 // pred_region
        // Predicated region
        $region17: #{series_decomp.1} parent=15 // pred_check
          %p133 = pneg %p52
        $region18: #{series_decomp.1} parent=15 // pred_check_branch
          %135 = sbr.rel (%p133) target = $region20
        $region19: #{series_decomp.1} parent=15 // pred_region
          %s136 = sand.u32 %s42, 1
          %s137 = scalar_lea.sflag [#allocation3], %s136
          %s138 = sand.u32 %s42, 1
          %s139 = smul.addr %s138, 8
          %s140 = scalar_lea.vmem [#allocation2], %s139
          %s142 = ssub.s32 128, 128
          %143 = vsyncadd %s137, %s142
          %s144 = sadd.s32 %s26, %s25
          %s145 = smul.addr %s144, 128
          %s146 = scalar_lea.hbm %s0, %s145
          %s148 = sshll.u32 %s140, 4
          %s149 = int_to_ptr.vmem [resolvable:$true] %s148
          %151 = dma.hbm_to_vmem [thread:$0]  %s146, 128, %s149, %s137
        $region20: #{series_decomp.1} parent=15 // pred_fallthru
          _
      $region16: #{series_decomp.1} parent=5 // pred_fallthru
        _
      %p152 = scmp.le.s32.totalorder 1, %s18
      %p153 = scmp.lt.s32.totalorder %s18, 3
      %p154 = pnand %p152, %p153
      %p155 = pneg %p154
      // Predicated region
      $region21: #{series_decomp.1} parent=5 // pred_check
        _
      $region22: #{series_decomp.1} parent=5 // pred_check_branch
        %157 = sbr.rel (%p154) target = $region24
      $region23: #{series_decomp.1} parent=5 // pred_region
        %s158 = ssub.s32 %s18, 1
        %s159 = sand.u32 %s45, 1
        %s160 = scalar_lea.sflag [#allocation3], %s159
        %s161 = sand.u32 %s45, 1
        %s162 = smul.addr %s161, 8
        %s163 = scalar_lea.vmem [#allocation2], %s162
        // Predicated region
        $region25: #{series_decomp.1} parent=23 // pred_check
          %p164 = pneg %p58
        $region26: #{series_decomp.1} parent=23 // pred_check_branch
          %166 = sbr.rel (%p164) target = $region28
        $region27: #{series_decomp.1} parent=23 // pred_region
          %167 = dma.done %s160, 128
        $region28: #{series_decomp.1} parent=23 // pred_fallthru
          _
        %s168 = sand.u32 %s45, 1
        %s169 = scalar_lea.sflag [#allocation3], %s168
        %s170 = sand.u32 %s45, 1
        %s171 = smul.addr %s170, 8
        %s172 = scalar_lea.vmem [#allocation2], %s171
        %p173 = pneg %p58
        %p174 = pneg %p55
        %p175 = pneg %p86
        %p176 = pneg %p83
        %s177 = sand.u32 %s73, 1
        %s178 = scalar_lea.sflag [#allocation4], %s177
        %s179 = sand.u32 %s73, 1
        %s180 = smul.addr %s179, 8
        %s181 = scalar_lea.vmem [#allocation5], %s180
        %p182 = pneg %p114
        %p183 = pneg %p111
        %s184 = sand.u32 %s101, 1
        %s185 = scalar_lea.sflag [#allocation7], %s184
        %s186 = sand.u32 %s101, 1
        %s187 = smul.addr %s186, 8
        %s188 = scalar_lea.vmem [#allocation6], %s187
        %v189 = vld [vmem:[%s163] sm:$0xff]
        %v190 = vlaneseq
        %v191 = vand.u32 %v190, 127
        %192 = vrot.lane.b32.xlu0 %v189, 2
        %v193 = vpop.permute.xlu0 %192
        %vm194 = vcmp.ge.s32.totalorder %v191, 2
        %v195 = vsel %vm194, %v193, 0.0
        %v196 = vadd.f32 %v189, %v195
        %197 = vrot.lane.b32.xlu0 %v189, 1
        %v198 = vpop.permute.xlu0 %197
        %vm199 = vcmp.ge.s32.totalorder %v191, 1
        %v200 = vsel %vm199, %v198, 0.0
        %v201 = vadd.f32 %v196, %v200
        %202 = vrot.lane.b32.xlu0 %v189, 127
        %v203 = vpop.permute.xlu0 %202
        %vm204 = vcmp.lt.s32.totalorder %v191, 127
        %v205 = vsel %vm204, %v203, 0.0
        %v206 = vadd.f32 %v201, %v205
        %207 = vrot.lane.b32.xlu0 %v189, 126
        %v208 = vpop.permute.xlu0 %207
        %vm209 = vcmp.lt.s32.totalorder %v191, 126
        %v210 = vsel %vm209, %v208, 0.0
        %v211 = vadd.f32 %v206, %v210
        %v212 = vmul.f32 %v211, 0.2
        %213 = vst [vmem:[%s188] sm:$0xff] %v212
        %v214 = vsub.f32 %v189, %v212
        %215 = vst [vmem:[%s181] sm:$0xff] %v214
        %s216 = sand.u32 %s73, 1
        %s217 = scalar_lea.sflag [#allocation4], %s216
        %s218 = sand.u32 %s73, 1
        %s219 = smul.addr %s218, 8
        %s220 = scalar_lea.vmem [#allocation5], %s219
        %s221 = sand.u32 %s101, 1
        %s222 = scalar_lea.sflag [#allocation7], %s221
        %s223 = sand.u32 %s101, 1
        %s224 = smul.addr %s223, 8
        %s225 = scalar_lea.vmem [#allocation6], %s224
        // Predicated region
        $region29: #{series_decomp.1} parent=23 // pred_check
          %p226 = pneg %p83
        $region30: #{series_decomp.1} parent=23 // pred_check_branch
          %228 = sbr.rel (%p226) target = $region32
        $region31: #{series_decomp.1} parent=23 // pred_region
          %s230 = ssub.s32 128, 128
          %231 = vsyncadd %s217, %s230
          %s232 = sadd.s32 %s28, %s27
          %s233 = smul.addr %s232, 128
          %s234 = scalar_lea.hbm %s1, %s233
          %s236 = sshll.u32 %s220, 4
          %s237 = int_to_ptr.vmem [resolvable:$true] %s236
          %239 = dma.vmem_to_hbm [thread:$0]  %s237, 128, %s234, %s217
        $region32: #{series_decomp.1} parent=23 // pred_fallthru
          _
        // Predicated region
        $region33: #{series_decomp.1} parent=23 // pred_check
          %p240 = pneg %p111
        $region34: #{series_decomp.1} parent=23 // pred_check_branch
          %242 = sbr.rel (%p240) target = $region36
        $region35: #{series_decomp.1} parent=23 // pred_region
          %s244 = ssub.s32 128, 128
          %245 = vsyncadd %s222, %s244
          %s246 = sadd.s32 %s28, %s27
          %s247 = smul.addr %s246, 128
          %s248 = scalar_lea.hbm %s2, %s247
          %s250 = sshll.u32 %s225, 4
          %s251 = int_to_ptr.vmem [resolvable:$true] %s250
          %253 = dma.vmem_to_hbm [thread:$0]  %s251, 128, %s248, %s222
        $region36: #{series_decomp.1} parent=23 // pred_fallthru
          _
      $region24: #{series_decomp.1} parent=5 // pred_fallthru
        _
      %p254 = scmp.le.s32.totalorder 2, %s18
      // Predicated region
      $region37: #{series_decomp.1} parent=5 // pred_check
        %p255 = pneg %p254
      $region38: #{series_decomp.1} parent=5 // pred_check_branch
        %257 = sbr.rel (%p255) target = $region40
      $region39: #{series_decomp.1} parent=5 // pred_region
        %s258 = ssub.s32 %s18, 2
        // Predicated region
        $region41: #{series_decomp.1} parent=39 // pred_check
          %p259 = pneg %p89
        $region42: #{series_decomp.1} parent=39 // pred_check_branch
          %261 = sbr.rel (%p259) target = $region44
        $region43: #{series_decomp.1} parent=39 // pred_region
          %s262 = sand.u32 %s74, 1
          %s263 = scalar_lea.sflag [#allocation4], %s262
          %s264 = sand.u32 %s74, 1
          %s265 = smul.addr %s264, 8
          %s266 = scalar_lea.vmem [#allocation5], %s265
          %267 = dma.done %s263, 128
        $region44: #{series_decomp.1} parent=39 // pred_fallthru
          _
        // Predicated region
        $region45: #{series_decomp.1} parent=39 // pred_check
          %p268 = pneg %p117
        $region46: #{series_decomp.1} parent=39 // pred_check_branch
          %270 = sbr.rel (%p268) target = $region48
        $region47: #{series_decomp.1} parent=39 // pred_region
          %s271 = sand.u32 %s102, 1
          %s272 = scalar_lea.sflag [#allocation7], %s271
          %s273 = sand.u32 %s102, 1
          %s274 = smul.addr %s273, 8
          %s275 = scalar_lea.vmem [#allocation6], %s274
          %276 = dma.done %s272, 128
        $region48: #{series_decomp.1} parent=39 // pred_fallthru
          _
      $region40: #{series_decomp.1} parent=5 // pred_fallthru
        _
    $region6: #{series_decomp.1} parent=1 // loop_footer
      %s22 = sadd.s32 1, %s18
    $region7: #{series_decomp.1} parent=1 // loop_footer_branch
      %17 = sbr.rel target = $region3
    $region8: #{series_decomp.1} parent=1 // loop_exit
      _
    %277 = vsyncpa [#allocation3], 1
    %s278 = scalar_lea.sflag [#allocation3], 1
    %279 = vsyncpa %s278, 1
    %280 = vsyncpa [#allocation4], 1
    %s281 = scalar_lea.sflag [#allocation4], 1
    %282 = vsyncpa %s281, 1
    %283 = vsyncpa [#allocation7], 1
    %s284 = scalar_lea.sflag [#allocation7], 1
    %285 = vsyncpa %s284, 1

</llo_original>
